<compile_context>
chip_gen: v5e
topology: v5e:2x2
jax: 0.10.0
libtpu: 0.0.40
codegen_flags: <defaults>
</compile_context>

<pallas_src>
import functools

import jax
import jax.numpy as jnp
from jax.experimental import pallas as pl
from jax.experimental.pallas import tpu as pltpu


def _softplus(x):
    # Stable softplus using only exp/log (guaranteed Mosaic lowering).
    return jnp.maximum(x, 0.0) + jnp.log(1.0 + jnp.exp(-jnp.abs(x)))


# ---------------------------------------------------------------------------
# Fused NCE kernel (one batch tile per grid step):
#   tti[b]       = target_time[b] - time_seq[b, len[b]-1]
#   dt           = [tti, sampled_dt]                       (col 0 = true event)
#   actual/noise = softplus(<e_type, h>) * exp(-rate*|dt|)
#   deno         = K * noise + actual + 1e-6
#   likeli       = where(col==0, actual, noise) / deno + 1e-6
#   loss        += -(1/B) * sum(log(likeli))               (SMEM accumulator)
# ---------------------------------------------------------------------------
def _fused_nce_kernel(K, rate_p, rate_q, inv_B,
                      time_seq_ref, len_ref, tgt_time_ref, sdt_ref,
                      e_p_ref, h_p_ref, e_q_ref, h_q_ref,
                      loss_ref):
    pid = pl.program_id(0)

    # ---- target time interval (gather_indexes folded in via one-hot select) ----
    time_seq = time_seq_ref[...].astype(jnp.float32)                  # [TB, S]
    lens = len_ref[...].astype(jnp.int32)                             # [TB, 1]
    col_s = jax.lax.broadcasted_iota(jnp.int32, time_seq.shape, 1)    # [TB, S]
    onehot = (col_s == (lens - 1)).astype(jnp.float32)
    last_time = jnp.sum(time_seq * onehot, axis=1, keepdims=True)     # [TB, 1]
    tti = tgt_time_ref[...].astype(jnp.float32) - last_time           # [TB, 1]

    # sdt_ref is sampled_dt pre-padded with a dummy col 0 -> [TB, K+1];
    # select tti into column 0 (avoids an in-kernel lane concatenate).
    sdt = sdt_ref[...].astype(jnp.float32)                            # [TB, K+1]
    col_k = jax.lax.broadcasted_iota(jnp.int32, sdt.shape, 1)         # [TB, K+1]
    dt = jnp.where(col_k == 0, tti, sdt)                              # [TB, K+1]
    abs_dt = jnp.abs(dt)

    # ---- intensity(dt, type | h) = softplus(<e_type, h>) * exp(-rate*|dt|) ----
    # VPU broadcast-mul + lane reduction; MXU would be <1% utilized at H=32, K+1=8.
    h_p = h_p_ref[...].astype(jnp.float32)                            # [TB, H]
    h_q = h_q_ref[...].astype(jnp.float32)
    score_p = jnp.sum(e_p_ref[...].astype(jnp.float32) * h_p[:, None, :], axis=-1)
    score_q = jnp.sum(e_q_ref[...].astype(jnp.float32) * h_q[:, None, :], axis=-1)

    actual_prob = _softplus(score_p) * jnp.exp(-rate_p * abs_dt)      # [TB, K+1]
    noise_prob = _softplus(score_q) * jnp.exp(-rate_q * abs_dt)       # [TB, K+1]

    # ---- NCE likelihood (matches the torch reference exactly: noise columns
    #      use noise/deno, not K*noise/deno) ----
    deno = K * noise_prob + actual_prob + 1e-6
    numer = jnp.where(col_k == 0, actual_prob, noise_prob)            # single divide
    likeli = numer / deno + 1e-6
    partial = jnp.sum(jnp.log(likeli))                                # scalar per tile

    @pl.when(pid == 0)
    def _():
        loss_ref[0, 0] = 0.0
    # Fold 1/B per tile -> loss = -mean_b(sum_k log likeli); no finalize needed.
    loss_ref[0, 0] += -partial * inv_B


def fused_nce_loss(time_seq, item_seq_len, target_time, sampled_dt,
                   e_p, h_p, e_q, h_q, *, K, rate_p, rate_q):
    B, S = time_seq.shape
    Kp1 = K + 1
    H = h_p.shape[1]

    # Batch tile: multiple of 8 (sublane), as large as comfortably fits VMEM.
    # NOTE: on v7x (64 MiB VMEM, 32 MiB scoped default) halve the tile relative
    # to v5e/v6e if the double-buffered footprint approaches the limit; the
    # batch axis could also be marked "parallel" with per-core partial sums to
    # use both v7x TensorCores.
    tile_b = None
    for cand in (512, 256, 128, 64, 32, 16, 8):
        if B % cand == 0:
            tile_b = cand
            break
    # TODO(synk): pad + mask the batch when B is not a multiple of 8.
    assert tile_b is not None, "batch size must be a multiple of 8"
    grid = (B // tile_b,)

    # Pad sampled_dt with a dummy col 0 (replaced by tti in-kernel) -> [B, K+1].
    sampled_dt_p = jnp.concatenate(
        [jnp.zeros((B, 1), sampled_dt.dtype), sampled_dt], axis=1)

    kernel = functools.partial(
        _fused_nce_kernel, float(K), float(rate_p), float(rate_q), 1.0 / B)

    out = pl.pallas_call(
        kernel,
        out_shape=jax.ShapeDtypeStruct((1, 1), jnp.float32),
        grid_spec=pltpu.PrefetchScalarGridSpec(
            num_scalar_prefetch=0,
            grid=grid,
            in_specs=[
                pl.BlockSpec((tile_b, S), lambda i: (i, 0)),          # time_seq
                pl.BlockSpec((tile_b, 1), lambda i: (i, 0)),          # item_seq_len
                pl.BlockSpec((tile_b, 1), lambda i: (i, 0)),          # target_time
                pl.BlockSpec((tile_b, Kp1), lambda i: (i, 0)),        # sampled_dt (padded)
                pl.BlockSpec((tile_b, Kp1, H), lambda i: (i, 0, 0)),  # e_p
                pl.BlockSpec((tile_b, H), lambda i: (i, 0)),          # h_p
                pl.BlockSpec((tile_b, Kp1, H), lambda i: (i, 0, 0)),  # e_q
                pl.BlockSpec((tile_b, H), lambda i: (i, 0)),          # h_q
            ],
            out_specs=pl.BlockSpec((1, 1), lambda i: (0, 0),
                                   memory_space=pltpu.MemorySpace.SMEM),
        ),
        compiler_params=pltpu.CompilerParams(
            # Reduction over batch tiles into a resident SMEM scalar.
            dimension_semantics=("arbitrary",)),
    )(time_seq, item_seq_len.reshape(B, 1), target_time.reshape(B, 1),
      sampled_dt_p, e_p, h_p, e_q, h_q)
    return out[0, 0]


# ---------------------------------------------------------------------------
# Deterministic synthetic stand-ins for the external p_model / q_model.
# TODO(synk): the real p_model / q_model (sequence encoder + TPP intensity) are
# external modules not defined in objectives/nce.py; these are synthetic stubs.
# ---------------------------------------------------------------------------
class SyntheticIntensityModel:
    def __init__(self, key, n_items, hidden, rate):
        k1, k2 = jax.random.split(key)
        self.item_emb = jax.random.normal(k1, (n_items, hidden), jnp.float32) * 0.1
        self.W = jax.random.normal(k2, (hidden, hidden), jnp.float32) * 0.1
        self.rate = rate

    def forward(self, item_seq, item_seq_len):
        # mean-pool valid item embeddings, then a linear map -> [B, H]
        B, S = item_seq.shape
        emb = self.item_emb[item_seq]                              # [B, S, H]
        valid = (jnp.arange(S)[None, :] < item_seq_len[:, None]).astype(jnp.float32)
        pooled = jnp.sum(emb * valid[..., None], axis=1) / jnp.maximum(
            item_seq_len[:, None].astype(jnp.float32), 1.0)
        return pooled @ self.W

    def get_intensity_give_time_type(self, dt, types, seq_output):
        # intensity(dt, type | h) = softplus(<e_type, h>) * exp(-rate * |dt|)
        e = self.item_emb[types]                                   # [B, K+1, H]
        score = jnp.einsum("bkh,bh->bk", e, seq_output)            # [B, K+1]
        return jax.nn.softplus(score) * jnp.exp(-self.rate * jnp.abs(dt))

    def sample_noises(self, item_seq, item_seq_len, time_seq, time_interval_seq,
                      target_time, K, probs):
        B = item_seq.shape[0]
        k1, k2 = jax.random.split(jax.random.PRNGKey(42))
        sampled_dt = jax.random.uniform(k1, (B, K), jnp.float32, 0.1, 2.0)
        sampled_type = jax.random.randint(k2, (B, K), 0, self.item_emb.shape[0])
        mask_noise = jnp.ones((B, K), jnp.float32)
        accept_prob = jnp.ones((B, K), jnp.float32)
        return sampled_dt, sampled_type, mask_noise, accept_prob


# ---------------------------------------------------------------------------
# C_NCE forward: encoders / embedding gathers in JAX, everything the module
# itself computes afterwards in one fused Pallas kernel.
# ---------------------------------------------------------------------------
class C_NCE:
    def __init__(self, K):
        self.K = K
        # nn.Parameter(torch.zeros(1, K)) -> deterministic zero init
        self.probs = jnp.zeros((1, K), jnp.float32)
        # TODO(synk): self.criterion = nn.CrossEntropyLoss() is defined in the
        # torch module but never used in forward; omitted.

    def forward(self, p_model, q_model, item_seq, item_seq_len, target_id,
                time_seq, time_interval_seq, target_time):
        sampled_dt, sampled_type, mask_noise, accept_prob = q_model.sample_noises(
            item_seq, item_seq_len, time_seq, time_interval_seq, target_time,
            self.K, self.probs)

        actual_sampled_type = jnp.concatenate(
            [target_id.reshape(-1, 1), sampled_type], axis=1)        # [B, K+1]

        # Black-box external models: embedding gather + sequence encoding in JAX.
        e_q = q_model.item_emb[actual_sampled_type]                  # [B, K+1, H]
        e_p = p_model.item_emb[actual_sampled_type]                  # [B, K+1, H]
        h_q = q_model.forward(item_seq, item_seq_len)                # [B, H]
        h_p = p_model.forward(item_seq, item_seq_len)                # [B, H]

        # NOTE: actual_noise_mask = cat(ones, mask_noise) is computed in the torch
        # module but never used in the loss, so it is omitted here.
        return fused_nce_loss(
            time_seq, item_seq_len, target_time, sampled_dt,
            e_p, h_p, e_q, h_q,
            K=self.K, rate_p=p_model.rate, rate_q=q_model.rate)      # Pallas


# ---------------------------------------------------------------------------
# Pure-JAX reference (line-by-line mirror of the torch module) for validation.
# ---------------------------------------------------------------------------
def c_nce_reference(K, probs, p_model, q_model, item_seq, item_seq_len, target_id,
                    time_seq, time_interval_seq, target_time):
    sampled_dt, sampled_type, mask_noise, accept_prob = q_model.sample_noises(
        item_seq, item_seq_len, time_seq, time_interval_seq, target_time, K, probs)
    last_time = jnp.take_along_axis(time_seq, (item_seq_len - 1)[:, None], axis=1)
    tti = target_time.reshape(-1, 1) - last_time
    actual_sampled_dt = jnp.concatenate([tti, sampled_dt], axis=1)
    actual_sampled_type = jnp.concatenate([target_id.reshape(-1, 1), sampled_type], 1)
    noise_seq_output = q_model.forward(item_seq, item_seq_len)
    noise_prob = q_model.get_intensity_give_time_type(
        actual_sampled_dt, actual_sampled_type, noise_seq_output)
    actual_seq_output = p_model.forward(item_seq, item_seq_len)
    actual_prob = p_model.get_intensity_give_time_type(
        actual_sampled_dt, actual_sampled_type, actual_seq_output)
    deno = K * noise_prob + actual_prob + 1e-6
    tmp1 = actual_prob / deno
    tmp2 = noise_prob / deno
    likeli = jnp.concatenate([tmp1[:, :1], tmp2[:, 1:]], axis=1) + 1e-6
    return -jnp.mean(jnp.sum(jnp.log(likeli), axis=1))


if __name__ == "__main__":
    B, S, K, H, N_ITEMS = 8, 16, 7, 32, 50

    key = jax.random.PRNGKey(0)
    k_items, k_len, k_tgt, k_time, k_p, k_q = jax.random.split(key, 6)

    item_seq = jax.random.randint(k_items, (B, S), 1, N_ITEMS)
    item_seq_len = jax.random.randint(k_len, (B,), 1, S + 1)
    target_id = jax.random.randint(k_tgt, (B,), 1, N_ITEMS)
    dt = jax.random.uniform(k_time, (B, S), jnp.float32, 0.1, 1.0)
    time_seq = jnp.cumsum(dt, axis=1)
    time_interval_seq = dt
    last_time = time_seq[jnp.arange(B), item_seq_len - 1]
    target_time = last_time + 0.5

    p_model = SyntheticIntensityModel(k_p, N_ITEMS, H, rate=0.5)
    q_model = SyntheticIntensityModel(k_q, N_ITEMS, H, rate=1.0)

    module = C_NCE(K)
    loss = module.forward(p_model, q_model, item_seq, item_seq_len, target_id,
                          time_seq, time_interval_seq, target_time)
    jax.block_until_ready(loss)

    loss_ref = c_nce_reference(K, module.probs, p_model, q_model, item_seq,
                               item_seq_len, target_id, time_seq,
                               time_interval_seq, target_time)
    jax.block_until_ready(loss_ref)

    assert jnp.isfinite(loss), "loss is not finite"
    assert jnp.allclose(loss, loss_ref, rtol=1e-4, atol=1e-5), (loss, loss_ref)
    print("KERNEL_OK")
</pallas_src>

<mosaic_0001>
module attributes {stable_mosaic.version = 11 : i64} {
  func.func @_fused_nce_kernel(%arg0: i32, %arg1: memref<8x16xf32, #tpu.memory_space<vmem>>, %arg2: memref<8x1xi32, #tpu.memory_space<vmem>>, %arg3: memref<8x1xf32, #tpu.memory_space<vmem>>, %arg4: memref<8x8xf32, #tpu.memory_space<vmem>>, %arg5: memref<8x8x32xf32, #tpu.memory_space<vmem>>, %arg6: memref<8x32xf32, #tpu.memory_space<vmem>>, %arg7: memref<8x8x32xf32, #tpu.memory_space<vmem>>, %arg8: memref<8x32xf32, #tpu.memory_space<vmem>>, %arg9: memref<1x1xf32, #tpu.memory_space<smem>>) attributes {dimension_semantics = [#tpu.dimension_semantics<arbitrary>], iteration_bounds = array<i64: 1>, scalar_prefetch = 0 : i64, scratch_operands = 0 : i64, tpu.core_type = #tpu.core_type<tc>, window_params = [{transform_indices = @transform_0, window_bounds = array<i64: 8, 16>}, {transform_indices = @transform_1, window_bounds = array<i64: 8, 1>}, {transform_indices = @transform_2, window_bounds = array<i64: 8, 1>}, {transform_indices = @transform_3, window_bounds = array<i64: 8, 8>}, {transform_indices = @transform_4, window_bounds = array<i64: 8, 8, 32>}, {transform_indices = @transform_5, window_bounds = array<i64: 8, 32>}, {transform_indices = @transform_6, window_bounds = array<i64: 8, 8, 32>}, {transform_indices = @transform_7, window_bounds = array<i64: 8, 32>}, {transform_indices = @transform_8, window_bounds = array<i64: 1, 1>}]} {
    %c0 = arith.constant 0 : index
    %c0_0 = arith.constant 0 : index
    %0 = vector.load %arg1[%c0, %c0_0] : memref<8x16xf32, #tpu.memory_space<vmem>>, vector<8x16xf32>
    %c0_1 = arith.constant 0 : index
    %c0_2 = arith.constant 0 : index
    %1 = vector.load %arg2[%c0_1, %c0_2] : memref<8x1xi32, #tpu.memory_space<vmem>>, vector<8x1xi32>
    %2 = tpu.iota {dimensions = array<i32: 1>} : vector<8x16xi32>
    %c1_i32 = arith.constant 1 : i32
    %3 = vector.broadcast %c1_i32 : i32 to vector<8x1xi32>
    %4 = arith.subi %1, %3 : vector<8x1xi32>
    %5 = vector.broadcast %4 : vector<8x1xi32> to vector<8x16xi32>
    %6 = arith.cmpi eq, %2, %5 : vector<8x16xi32>
    %7 = arith.extui %6 : vector<8x16xi1> to vector<8x16xi32>
    %8 = arith.sitofp %7 : vector<8x16xi32> to vector<8x16xf32>
    %9 = arith.mulf %0, %8 : vector<8x16xf32>
    %cst = arith.constant dense<0.000000e+00> : vector<8xf32>
    %10 = vector.multi_reduction <add>, %9, %cst [1] : vector<8x16xf32> to vector<8xf32>
    %11 = vector.shape_cast %10 : vector<8xf32> to vector<8x1xf32>
    %c0_3 = arith.constant 0 : index
    %c0_4 = arith.constant 0 : index
    %12 = vector.load %arg3[%c0_3, %c0_4] : memref<8x1xf32, #tpu.memory_space<vmem>>, vector<8x1xf32>
    %13 = arith.subf %12, %11 : vector<8x1xf32>
    %c0_5 = arith.constant 0 : index
    %c0_6 = arith.constant 0 : index
    %14 = vector.load %arg4[%c0_5, %c0_6] : memref<8x8xf32, #tpu.memory_space<vmem>>, vector<8x8xf32>
    %15 = tpu.iota {dimensions = array<i32: 1>} : vector<8x8xi32>
    %c0_i32 = arith.constant 0 : i32
    %16 = vector.broadcast %c0_i32 : i32 to vector<8x8xi32>
    %17 = arith.cmpi eq, %15, %16 : vector<8x8xi32>
    %18 = vector.shape_cast %13 : vector<8x1xf32> to vector<8x1xf32>
    %19 = vector.broadcast %18 : vector<8x1xf32> to vector<8x8xf32>
    %20 = arith.select %17, %19, %14 : vector<8x8xi1>, vector<8x8xf32>
    %21 = math.absf %20 : vector<8x8xf32>
    %c0_7 = arith.constant 0 : index
    %c0_8 = arith.constant 0 : index
    %22 = vector.load %arg6[%c0_7, %c0_8] : memref<8x32xf32, #tpu.memory_space<vmem>>, vector<8x32xf32>
    %c0_9 = arith.constant 0 : index
    %c0_10 = arith.constant 0 : index
    %23 = vector.load %arg8[%c0_9, %c0_10] : memref<8x32xf32, #tpu.memory_space<vmem>>, vector<8x32xf32>
    %c0_11 = arith.constant 0 : index
    %c0_12 = arith.constant 0 : index
    %c0_13 = arith.constant 0 : index
    %24 = vector.load %arg5[%c0_11, %c0_12, %c0_13] : memref<8x8x32xf32, #tpu.memory_space<vmem>>, vector<8x8x32xf32>
    %25 = vector.shape_cast %22 : vector<8x32xf32> to vector<8x1x32xf32>
    %26 = vector.broadcast %25 : vector<8x1x32xf32> to vector<8x8x32xf32>
    %27 = arith.mulf %24, %26 : vector<8x8x32xf32>
    %cst_14 = arith.constant dense<0.000000e+00> : vector<8x8xf32>
    %28 = vector.multi_reduction <add>, %27, %cst_14 [2] : vector<8x8x32xf32> to vector<8x8xf32>
    %c0_15 = arith.constant 0 : index
    %c0_16 = arith.constant 0 : index
    %c0_17 = arith.constant 0 : index
    %29 = vector.load %arg7[%c0_15, %c0_16, %c0_17] : memref<8x8x32xf32, #tpu.memory_space<vmem>>, vector<8x8x32xf32>
    %30 = vector.shape_cast %23 : vector<8x32xf32> to vector<8x1x32xf32>
    %31 = vector.broadcast %30 : vector<8x1x32xf32> to vector<8x8x32xf32>
    %32 = arith.mulf %29, %31 : vector<8x8x32xf32>
    %cst_18 = arith.constant dense<0.000000e+00> : vector<8x8xf32>
    %33 = vector.multi_reduction <add>, %32, %cst_18 [2] : vector<8x8x32xf32> to vector<8x8xf32>
    %cst_19 = arith.constant 0.000000e+00 : f32
    %34 = vector.broadcast %cst_19 : f32 to vector<8x8xf32>
    %35 = arith.maximumf %28, %34 : vector<8x8xf32>
    %36 = math.absf %28 : vector<8x8xf32>
    %cst_20 = arith.constant 0.000000e+00 : f32
    %37 = vector.broadcast %cst_20 : f32 to vector<8x8xf32>
    %38 = arith.subf %37, %36 : vector<8x8xf32>
    %39 = math.exp %38 : vector<8x8xf32>
    %cst_21 = arith.constant 1.000000e+00 : f32
    %40 = vector.broadcast %cst_21 : f32 to vector<8x8xf32>
    %41 = arith.addf %40, %39 : vector<8x8xf32>
    %42 = math.log %41 : vector<8x8xf32>
    %43 = arith.addf %35, %42 : vector<8x8xf32>
    %cst_22 = arith.constant -5.000000e-01 : f32
    %44 = vector.broadcast %cst_22 : f32 to vector<8x8xf32>
    %45 = arith.mulf %44, %21 : vector<8x8xf32>
    %46 = math.exp %45 : vector<8x8xf32>
    %47 = arith.mulf %43, %46 : vector<8x8xf32>
    %cst_23 = arith.constant 0.000000e+00 : f32
    %48 = vector.broadcast %cst_23 : f32 to vector<8x8xf32>
    %49 = arith.maximumf %33, %48 : vector<8x8xf32>
    %50 = math.absf %33 : vector<8x8xf32>
    %cst_24 = arith.constant 0.000000e+00 : f32
    %51 = vector.broadcast %cst_24 : f32 to vector<8x8xf32>
    %52 = arith.subf %51, %50 : vector<8x8xf32>
    %53 = math.exp %52 : vector<8x8xf32>
    %cst_25 = arith.constant 1.000000e+00 : f32
    %54 = vector.broadcast %cst_25 : f32 to vector<8x8xf32>
    %55 = arith.addf %54, %53 : vector<8x8xf32>
    %56 = math.log %55 : vector<8x8xf32>
    %57 = arith.addf %49, %56 : vector<8x8xf32>
    %cst_26 = arith.constant -1.000000e+00 : f32
    %58 = vector.broadcast %cst_26 : f32 to vector<8x8xf32>
    %59 = arith.mulf %58, %21 : vector<8x8xf32>
    %60 = math.exp %59 : vector<8x8xf32>
    %61 = arith.mulf %57, %60 : vector<8x8xf32>
    %cst_27 = arith.constant 7.000000e+00 : f32
    %62 = vector.broadcast %cst_27 : f32 to vector<8x8xf32>
    %63 = arith.mulf %62, %61 : vector<8x8xf32>
    %64 = arith.addf %63, %47 : vector<8x8xf32>
    %cst_28 = arith.constant 9.99999997E-7 : f32
    %65 = vector.broadcast %cst_28 : f32 to vector<8x8xf32>
    %66 = arith.addf %64, %65 : vector<8x8xf32>
    %c0_i32_29 = arith.constant 0 : i32
    %67 = vector.broadcast %c0_i32_29 : i32 to vector<8x8xi32>
    %68 = arith.cmpi eq, %15, %67 : vector<8x8xi32>
    %69 = arith.select %68, %47, %61 : vector<8x8xi1>, vector<8x8xf32>
    %70 = arith.divf %69, %66 : vector<8x8xf32>
    %cst_30 = arith.constant 9.99999997E-7 : f32
    %71 = vector.broadcast %cst_30 : f32 to vector<8x8xf32>
    %72 = arith.addf %70, %71 : vector<8x8xf32>
    %73 = math.log %72 : vector<8x8xf32>
    %74 = vector.shape_cast %73 : vector<8x8xf32> to vector<1x8x8xf32>
    %cst_31 = arith.constant dense<0.000000e+00> : vector<1xf32>
    %75 = vector.multi_reduction <add>, %74, %cst_31 [1, 2] : vector<1x8x8xf32> to vector<1xf32>
    %76 = vector.shape_cast %75 : vector<1xf32> to vector<1x1x1xf32>
    %77 = vector.extract %76[0, 0, 0] : f32 from vector<1x1x1xf32>
    %c0_i32_32 = arith.constant 0 : i32
    %78 = arith.cmpi eq, %arg0, %c0_i32_32 : i32
    %79 = arith.extui %78 : i1 to i32
    %c0_i32_33 = arith.constant 0 : i32
    %80 = arith.cmpi ne, %79, %c0_i32_33 : i32
    scf.if %80 {
      %cst_40 = arith.constant 0.000000e+00 : f32
      %c0_41 = arith.constant 0 : index
      %c0_42 = arith.constant 0 : index
      %86 = memref.load %arg9[%c0_41, %c0_42] : memref<1x1xf32, #tpu.memory_space<smem>>
      memref.store %cst_40, %arg9[%c0_41, %c0_42] : memref<1x1xf32, #tpu.memory_space<smem>>
    } else {
    }
    %c0_34 = arith.constant 0 : index
    %c0_35 = arith.constant 0 : index
    %81 = memref.load %arg9[%c0_34, %c0_35] : memref<1x1xf32, #tpu.memory_space<smem>>
    %cst_36 = arith.constant 0.000000e+00 : f32
    %82 = arith.subf %cst_36, %77 : f32
    %cst_37 = arith.constant 1.250000e-01 : f32
    %83 = arith.mulf %82, %cst_37 : f32
    %84 = arith.addf %81, %83 : f32
    %c0_38 = arith.constant 0 : index
    %c0_39 = arith.constant 0 : index
    %85 = memref.load %arg9[%c0_38, %c0_39] : memref<1x1xf32, #tpu.memory_space<smem>>
    memref.store %84, %arg9[%c0_38, %c0_39] : memref<1x1xf32, #tpu.memory_space<smem>>
    return
  }
  func.func @transform_0(%arg0: i32) -> (i32, i32) {
    %c0_i32 = arith.constant 0 : i32
    %c0_i32_0 = arith.constant 0 : i32
    return %arg0, %c0_i32 : i32, i32
  }
  func.func @transform_1(%arg0: i32) -> (i32, i32) {
    %c0_i32 = arith.constant 0 : i32
    %c0_i32_0 = arith.constant 0 : i32
    return %arg0, %c0_i32 : i32, i32
  }
  func.func @transform_2(%arg0: i32) -> (i32, i32) {
    %c0_i32 = arith.constant 0 : i32
    %c0_i32_0 = arith.constant 0 : i32
    return %arg0, %c0_i32 : i32, i32
  }
  func.func @transform_3(%arg0: i32) -> (i32, i32) {
    %c0_i32 = arith.constant 0 : i32
    %c0_i32_0 = arith.constant 0 : i32
    return %arg0, %c0_i32 : i32, i32
  }
  func.func @transform_4(%arg0: i32) -> (i32, i32, i32) {
    %c0_i32 = arith.constant 0 : i32
    %c0_i32_0 = arith.constant 0 : i32
    %c0_i32_1 = arith.constant 0 : i32
    return %arg0, %c0_i32, %c0_i32_0 : i32, i32, i32
  }
  func.func @transform_5(%arg0: i32) -> (i32, i32) {
    %c0_i32 = arith.constant 0 : i32
    %c0_i32_0 = arith.constant 0 : i32
    return %arg0, %c0_i32 : i32, i32
  }
  func.func @transform_6(%arg0: i32) -> (i32, i32, i32) {
    %c0_i32 = arith.constant 0 : i32
    %c0_i32_0 = arith.constant 0 : i32
    %c0_i32_1 = arith.constant 0 : i32
    return %arg0, %c0_i32, %c0_i32_0 : i32, i32, i32
  }
  func.func @transform_7(%arg0: i32) -> (i32, i32) {
    %c0_i32 = arith.constant 0 : i32
    %c0_i32_0 = arith.constant 0 : i32
    return %arg0, %c0_i32 : i32, i32
  }
  func.func @transform_8(%arg0: i32) -> (i32, i32) {
    %c0_i32 = arith.constant 0 : i32
    %c0_i32_0 = arith.constant 0 : i32
    %c0_i32_1 = arith.constant 0 : i32
    return %c0_i32, %c0_i32_0 : i32, i32
  }
}

</mosaic_0001>

<llo_original>
// kernel: tpu_custom_call.1
$region0: #{tpu_custom_call.1}
  #allocation0 [shape = 'u32[]', space=smem, size = 0x4, offset = 0x4, fixed_abs, tag = 'smem constant byte address 0x4 - core index']
  #allocation1 [shape = 'u32[72,128]{1,0:T(1,128)}', space=vmem, size = 0x9000, scoped, tag = 'internal scratch']
  %s0 = inlined_call_operand.vmem [shape: f32[8,16], index: 0, kind: input, shape index: {}]
  %s1 = inlined_call_operand.vmem [shape: s32[8,1], index: 1, kind: input, shape index: {}]
  %s2 = inlined_call_operand.vmem [shape: f32[8,1], index: 2, kind: input, shape index: {}]
  %s3 = inlined_call_operand.vmem [shape: f32[8,8], index: 3, kind: input, shape index: {}]
  %s4 = inlined_call_operand.hbm [shape: f32[8,8,32], index: 4, kind: input, shape index: {}]
  %s5 = inlined_call_operand.hbm [shape: f32[8,32], index: 5, kind: input, shape index: {}]
  %s6 = inlined_call_operand.hbm [shape: f32[8,8,32], index: 6, kind: input, shape index: {}]
  %s7 = inlined_call_operand.hbm [shape: f32[8,32], index: 7, kind: input, shape index: {}]
  %s8 = inlined_call_operand.hbm [shape: f32[1,1], index: 8, kind: output, shape index: {}]
  %s9 = sld [smem:[#allocation0]]
  $region62: #{tpu_custom_call.1} parent=0
    _
  %s11 = ssub.s32 1, %s9
  %s12 = scalar_select 0, %s11, %s9
  $region1: #{tpu_custom_call.1} parent=0
    #allocation2 [shape = 'u8[32768]{0}', space=vmem, size = 0x8000, scoped, tag = 'input window, operand 4, single buffered']
    #allocation3 [shape = 's32[1]{0}', space=sflag, size = 0x4, scoped, tag = 'scoped memory for tpu_custom_call.1']
    #allocation4 [shape = 's32[1]{0}', space=sflag, size = 0x4, scoped, tag = 'scoped memory for tpu_custom_call.1']
    #allocation5 [shape = 'u8[4096]{0}', space=vmem, size = 0x1000, scoped, tag = 'input window, operand 5, single buffered']
    #allocation6 [shape = 's32[1]{0}', space=sflag, size = 0x4, scoped, tag = 'scoped memory for tpu_custom_call.1']
    #allocation7 [shape = 'u8[32768]{0}', space=vmem, size = 0x8000, scoped, tag = 'input window, operand 6, single buffered']
    #allocation8 [shape = 'u8[4096]{0}', space=vmem, size = 0x1000, scoped, tag = 'input window, operand 7, single buffered']
    #allocation9 [shape = 's32[1]{0}', space=sflag, size = 0x4, scoped, tag = 'scoped memory for tpu_custom_call.1']
    #allocation10 [shape = 'u8[512]{0}', space=smem, size = 0x200, scoped, tag = 'output window, operand 0, single buffered']
    %13 = vsyncpa [#allocation3], 0
    %14 = vsyncpa [#allocation6], 0
    %15 = vsyncpa [#allocation9], 0
    %16 = vsyncpa [#allocation4], 0
    // Predicated region
    $region2: #{tpu_custom_call.1} parent=1 // pred_check
      _
    $region3: #{tpu_custom_call.1} parent=1 // pred_check_branch
      %18 = sbr.rel (0) target = $region5
    $region4: #{tpu_custom_call.1} parent=1 // pred_region
      _
    $region5: #{tpu_custom_call.1} parent=1 // pred_fallthru
      _
    // Predicated region
    $region6: #{tpu_custom_call.1} parent=1 // pred_check
      _
    $region7: #{tpu_custom_call.1} parent=1 // pred_check_branch
      %20 = sbr.rel (0) target = $region9
    $region8: #{tpu_custom_call.1} parent=1 // pred_region
      _
    $region9: #{tpu_custom_call.1} parent=1 // pred_fallthru
      _
    // Predicated region
    $region10: #{tpu_custom_call.1} parent=1 // pred_check
      _
    $region11: #{tpu_custom_call.1} parent=1 // pred_check_branch
      %22 = sbr.rel (0) target = $region13
    $region12: #{tpu_custom_call.1} parent=1 // pred_region
      _
    $region13: #{tpu_custom_call.1} parent=1 // pred_fallthru
      _
    // Predicated region
    $region14: #{tpu_custom_call.1} parent=1 // pred_check
      _
    $region15: #{tpu_custom_call.1} parent=1 // pred_check_branch
      %24 = sbr.rel (0) target = $region17
    $region16: #{tpu_custom_call.1} parent=1 // pred_region
      _
    $region17: #{tpu_custom_call.1} parent=1 // pred_fallthru
      _
    // Predicated region
    $region18: #{tpu_custom_call.1} parent=1 // pred_check
      _
    $region19: #{tpu_custom_call.1} parent=1 // pred_check_branch
      %26 = sbr.rel (0) target = $region21
    $region20: #{tpu_custom_call.1} parent=1 // pred_region
      %28 = vsyncadd [#allocation3], 0
      %s29 = sshll.u32 %s4, 4
      %s30 = int_to_ptr.hbm [resolvable:$true] %s29
      %s31 = sshll.u32 [#allocation2], 4
      %s32 = int_to_ptr.vmem [resolvable:$true] %s31
      %37 = dma.hbm_to_vmem [thread:$0]  %s30, 1024, %s32, [#allocation3], 128, 128, 8
    $region21: #{tpu_custom_call.1} parent=1 // pred_fallthru
      _
    // Predicated region
    $region22: #{tpu_custom_call.1} parent=1 // pred_check
      _
    $region23: #{tpu_custom_call.1} parent=1 // pred_check_branch
      %39 = sbr.rel (0) target = $region25
    $region24: #{tpu_custom_call.1} parent=1 // pred_region
      %41 = vsyncadd [#allocation6], 0
      %s43 = sshll.u32 %s5, 4
      %s44 = int_to_ptr.hbm [resolvable:$true] %s43
      %s45 = sshll.u32 [#allocation5], 4
      %s46 = int_to_ptr.vmem [resolvable:$true] %s45
      %48 = dma.hbm_to_vmem [thread:$0]  %s44, 128, %s46, [#allocation6]
    $region25: #{tpu_custom_call.1} parent=1 // pred_fallthru
      _
    // Predicated region
    $region26: #{tpu_custom_call.1} parent=1 // pred_check
      _
    $region27: #{tpu_custom_call.1} parent=1 // pred_check_branch
      %50 = sbr.rel (0) target = $region29
    $region28: #{tpu_custom_call.1} parent=1 // pred_region
      %52 = vsyncadd [#allocation6], 0
      %s53 = sshll.u32 %s6, 4
      %s54 = int_to_ptr.hbm [resolvable:$true] %s53
      %s55 = sshll.u32 [#allocation7], 4
      %s56 = int_to_ptr.vmem [resolvable:$true] %s55
      %61 = dma.hbm_to_vmem [thread:$0]  %s54, 1024, %s56, [#allocation6], 128, 128, 8
    $region29: #{tpu_custom_call.1} parent=1 // pred_fallthru
      _
    // Predicated region
    $region30: #{tpu_custom_call.1} parent=1 // pred_check
      _
    $region31: #{tpu_custom_call.1} parent=1 // pred_check_branch
      %63 = sbr.rel (0) target = $region33
    $region32: #{tpu_custom_call.1} parent=1 // pred_region
      %65 = vsyncadd [#allocation9], 0
      %s67 = sshll.u32 %s7, 4
      %s68 = int_to_ptr.hbm [resolvable:$true] %s67
      %s69 = sshll.u32 [#allocation8], 4
      %s70 = int_to_ptr.vmem [resolvable:$true] %s69
      %72 = dma.hbm_to_vmem [thread:$0]  %s68, 128, %s70, [#allocation9]
    $region33: #{tpu_custom_call.1} parent=1 // pred_fallthru
      _
    // Predicated region
    $region34: #{tpu_custom_call.1} parent=1 // pred_check
      _
    $region35: #{tpu_custom_call.1} parent=1 // pred_check_branch
      %74 = sbr.rel (0) target = $region37
    $region36: #{tpu_custom_call.1} parent=1 // pred_region
      %76 = dma.done [#allocation3], 1024
    $region37: #{tpu_custom_call.1} parent=1 // pred_fallthru
      _
    // Predicated region
    $region38: #{tpu_custom_call.1} parent=1 // pred_check
      _
    $region39: #{tpu_custom_call.1} parent=1 // pred_check_branch
      %78 = sbr.rel (0) target = $region41
    $region40: #{tpu_custom_call.1} parent=1 // pred_region
      %80 = dma.done [#allocation6], 128
    $region41: #{tpu_custom_call.1} parent=1 // pred_fallthru
      _
    // Predicated region
    $region42: #{tpu_custom_call.1} parent=1 // pred_check
      _
    $region43: #{tpu_custom_call.1} parent=1 // pred_check_branch
      %82 = sbr.rel (0) target = $region45
    $region44: #{tpu_custom_call.1} parent=1 // pred_region
      %84 = dma.done [#allocation6], 1024
    $region45: #{tpu_custom_call.1} parent=1 // pred_fallthru
      _
    // Predicated region
    $region46: #{tpu_custom_call.1} parent=1 // pred_check
      _
    $region47: #{tpu_custom_call.1} parent=1 // pred_check_branch
      %86 = sbr.rel (0) target = $region49
    $region48: #{tpu_custom_call.1} parent=1 // pred_region
      %88 = dma.done [#allocation9], 128
    $region49: #{tpu_custom_call.1} parent=1 // pred_fallthru
      _
    %v89 = vld [vmem:[%s0] sm:$0xff]
    %v90 = vld [vmem:[%s1] sm:$0xff]
    %v91 = vlaneseq
    %v92 = vand.u32 %v91, 127
    %v93 = vsub.s32 %v90, 1
    %94 = vset.pattern.permute.xlu0 0
    %95 = vperm.xlu0 %94, %v93
    %v96 = vpop.permute.xlu0 %95
    %vm97 = vcmp.eq.s32.totalorder %v92, %v96
    %v98 = vsel %vm97, 1, 0
    %v99 = vcvt.s32.f32 %v98
    %v100 = vmul.f32 %v89, %v99
    %vm101 = vcmask 130048
    %v102 = vsel %vm101, %v100, 0.0
    %103 = vadd.xlane.f32.xlu0 %v102
    %v104 = vpop.xlane.xlu0 %103
    %v105 = vld [vmem:[%s2] sm:$0xff]
    %v106 = vsub.f32 %v105, %v104
    %v107 = vld [vmem:[%s3] sm:$0xff]
    %vm108 = vcmp.eq.s32.totalorder %v92, 0
    %110 = vset.pattern.permute.xlu0 0
    %111 = vperm.xlu0 %110, %v106
    %v112 = vpop.permute.xlu0 %111
    %v114 = vsel %vm108, %v112, %v107
    %v115 = vand.u32 2147483647, %v114
    %v116 = vld [vmem:[#allocation5] sm:$0xff]
    %v117 = vld [vmem:[#allocation8] sm:$0xff]
    %v118 = vld [vmem:[#allocation2] sm:$0xff]
    %v119 = vld [vmem:[#allocation2 + $0x8] sm:$0xff]
    %v120 = vld [vmem:[#allocation2 + $0x10] sm:$0xff]
    %v121 = vld [vmem:[#allocation2 + $0x18] sm:$0xff]
    %v122 = vld [vmem:[#allocation2 + $0x20] sm:$0xff]
    %v123 = vld [vmem:[#allocation2 + $0x28] sm:$0xff]
    %v124 = vld [vmem:[#allocation2 + $0x30] sm:$0xff]
    %v125 = vld [vmem:[#allocation2 + $0x38] sm:$0xff]
    %v127 = vrot.slane %v116, 1
    %v128 = vrot.slane %v116, 2
    %v129 = vrot.slane %v116, 3
    %v130 = vrot.slane %v116, 4
    %v131 = vrot.slane %v116, 5
    %v132 = vrot.slane %v116, 6
    %v133 = vrot.slane %v116, 7
    %v134 = vperm.slane %v116, 0
    %v135 = vperm.slane %v127, 0
    %v136 = vperm.slane %v128, 0
    %v137 = vperm.slane %v129, 0
    %v138 = vperm.slane %v130, 0
    %v139 = vperm.slane %v131, 0
    %v140 = vperm.slane %v132, 0
    %v141 = vperm.slane %v133, 0
    %v150 = vmul.f32 %v118, %v134
    %v151 = vmul.f32 %v119, %v135
    %v152 = vmul.f32 %v120, %v136
    %v153 = vmul.f32 %v121, %v137
    %v154 = vmul.f32 %v122, %v138
    %v155 = vmul.f32 %v123, %v139
    %v156 = vmul.f32 %v124, %v140
    %v157 = vmul.f32 %v125, %v141
    %vm158 = vcmask 261120
    %v159 = vsel %vm158, %v150, 0.0
    %160 = vadd.xlane.f32.xlu0 %v159
    %v161 = vpop.xlane.xlu0 %160
    %v162 = vsel %vm158, %v151, 0.0
    %163 = vadd.xlane.f32.xlu0 %v162
    %v164 = vpop.xlane.xlu0 %163
    %v165 = vsel %vm158, %v152, 0.0
    %166 = vadd.xlane.f32.xlu0 %v165
    %v167 = vpop.xlane.xlu0 %166
    %v168 = vsel %vm158, %v153, 0.0
    %169 = vadd.xlane.f32.xlu0 %v168
    %v170 = vpop.xlane.xlu0 %169
    %v171 = vsel %vm158, %v154, 0.0
    %172 = vadd.xlane.f32.xlu0 %v171
    %v173 = vpop.xlane.xlu0 %172
    %v174 = vsel %vm158, %v155, 0.0
    %175 = vadd.xlane.f32.xlu0 %v174
    %v176 = vpop.xlane.xlu0 %175
    %v177 = vsel %vm158, %v156, 0.0
    %178 = vadd.xlane.f32.xlu0 %v177
    %v179 = vpop.xlane.xlu0 %178
    %v180 = vsel %vm158, %v157, 0.0
    %181 = vadd.xlane.f32.xlu0 %v180
    %v182 = vpop.xlane.xlu0 %181
    %v183 = vld [vmem:[#allocation7] sm:$0xff]
    %v184 = vld [vmem:[#allocation7 + $0x8] sm:$0xff]
    %v185 = vld [vmem:[#allocation7 + $0x10] sm:$0xff]
    %v186 = vld [vmem:[#allocation7 + $0x18] sm:$0xff]
    %v187 = vld [vmem:[#allocation7 + $0x20] sm:$0xff]
    %v188 = vld [vmem:[#allocation7 + $0x28] sm:$0xff]
    %v189 = vld [vmem:[#allocation7 + $0x30] sm:$0xff]
    %v190 = vld [vmem:[#allocation7 + $0x38] sm:$0xff]
    %v192 = vrot.slane %v117, 1
    %v193 = vrot.slane %v117, 2
    %v194 = vrot.slane %v117, 3
    %v195 = vrot.slane %v117, 4
    %v196 = vrot.slane %v117, 5
    %v197 = vrot.slane %v117, 6
    %v198 = vrot.slane %v117, 7
    %v199 = vperm.slane %v117, 0
    %v200 = vperm.slane %v192, 0
    %v201 = vperm.slane %v193, 0
    %v202 = vperm.slane %v194, 0
    %v203 = vperm.slane %v195, 0
    %v204 = vperm.slane %v196, 0
    %v205 = vperm.slane %v197, 0
    %v206 = vperm.slane %v198, 0
    %v215 = vmul.f32 %v183, %v199
    %v216 = vmul.f32 %v184, %v200
    %v217 = vmul.f32 %v185, %v201
    %v218 = vmul.f32 %v186, %v202
    %v219 = vmul.f32 %v187, %v203
    %v220 = vmul.f32 %v188, %v204
    %v221 = vmul.f32 %v189, %v205
    %v222 = vmul.f32 %v190, %v206
    %v223 = vsel %vm158, %v215, 0.0
    %224 = vadd.xlane.f32.xlu0 %v223
    %v225 = vpop.xlane.xlu0 %224
    %v226 = vsel %vm158, %v216, 0.0
    %227 = vadd.xlane.f32.xlu0 %v226
    %v228 = vpop.xlane.xlu0 %227
    %v229 = vsel %vm158, %v217, 0.0
    %230 = vadd.xlane.f32.xlu0 %v229
    %v231 = vpop.xlane.xlu0 %230
    %v232 = vsel %vm158, %v218, 0.0
    %233 = vadd.xlane.f32.xlu0 %v232
    %v234 = vpop.xlane.xlu0 %233
    %v235 = vsel %vm158, %v219, 0.0
    %236 = vadd.xlane.f32.xlu0 %v235
    %v237 = vpop.xlane.xlu0 %236
    %v238 = vsel %vm158, %v220, 0.0
    %239 = vadd.xlane.f32.xlu0 %v238
    %v240 = vpop.xlane.xlu0 %239
    %v241 = vsel %vm158, %v221, 0.0
    %242 = vadd.xlane.f32.xlu0 %v241
    %v243 = vpop.xlane.xlu0 %242
    %v244 = vsel %vm158, %v222, 0.0
    %245 = vadd.xlane.f32.xlu0 %v244
    %v246 = vpop.xlane.xlu0 %245
    %v247 = vmax.f32 %v161, 0.0
    %v248 = vmax.f32 %v164, 0.0
    %v249 = vmax.f32 %v167, 0.0
    %v250 = vmax.f32 %v170, 0.0
    %v251 = vmax.f32 %v173, 0.0
    %v252 = vmax.f32 %v176, 0.0
    %v253 = vmax.f32 %v179, 0.0
    %v254 = vmax.f32 %v182, 0.0
    %v255 = vand.u32 2147483647, %v161
    %v256 = vand.u32 2147483647, %v164
    %v257 = vand.u32 2147483647, %v167
    %v258 = vand.u32 2147483647, %v170
    %v259 = vand.u32 2147483647, %v173
    %v260 = vand.u32 2147483647, %v176
    %v261 = vand.u32 2147483647, %v179
    %v262 = vand.u32 2147483647, %v182
    %v263 = vsub.f32 0.0, %v255
    %v264 = vsub.f32 0.0, %v256
    %v265 = vsub.f32 0.0, %v257
    %v266 = vsub.f32 0.0, %v258
    %v267 = vsub.f32 0.0, %v259
    %v268 = vsub.f32 0.0, %v260
    %v269 = vsub.f32 0.0, %v261
    %v270 = vsub.f32 0.0, %v262
    %v271 = vmul.f32 %v263, 1.442695
    %v272 = vpow.pop %v271
    %v273 = vmul.f32 %v264, 1.442695
    %v274 = vpow.pop %v273
    %v275 = vmul.f32 %v265, 1.442695
    %v276 = vpow.pop %v275
    %v277 = vmul.f32 %v266, 1.442695
    %v278 = vpow.pop %v277
    %v279 = vmul.f32 %v267, 1.442695
    %v280 = vpow.pop %v279
    %v281 = vmul.f32 %v268, 1.442695
    %v282 = vpow.pop %v281
    %v283 = vmul.f32 %v269, 1.442695
    %v284 = vpow.pop %v283
    %v285 = vmul.f32 %v270, 1.442695
    %v286 = vpow.pop %v285
    %v287 = vadd.f32 %v272, 1.0
    %v288 = vadd.f32 %v274, 1.0
    %v289 = vadd.f32 %v276, 1.0
    %v290 = vadd.f32 %v278, 1.0
    %v291 = vadd.f32 %v280, 1.0
    %v292 = vadd.f32 %v282, 1.0
    %v293 = vadd.f32 %v284, 1.0
    %v294 = vadd.f32 %v286, 1.0
    %v295 = vlog2.pop %v287
    %v296 = vmul.f32 %v295, 0.6931472
    %v297 = vlog2.pop %v288
    %v298 = vmul.f32 %v297, 0.6931472
    %v299 = vlog2.pop %v289
    %v300 = vmul.f32 %v299, 0.6931472
    %v301 = vlog2.pop %v290
    %v302 = vmul.f32 %v301, 0.6931472
    %v303 = vlog2.pop %v291
    %v304 = vmul.f32 %v303, 0.6931472
    %v305 = vlog2.pop %v292
    %v306 = vmul.f32 %v305, 0.6931472
    %v307 = vlog2.pop %v293
    %v308 = vmul.f32 %v307, 0.6931472
    %v309 = vlog2.pop %v294
    %v310 = vmul.f32 %v309, 0.6931472
    %v311 = vadd.f32 %v247, %v296
    %v312 = vadd.f32 %v248, %v298
    %v313 = vadd.f32 %v249, %v300
    %v314 = vadd.f32 %v250, %v302
    %v315 = vadd.f32 %v251, %v304
    %v316 = vadd.f32 %v252, %v306
    %v317 = vadd.f32 %v253, %v308
    %v318 = vadd.f32 %v254, %v310
    %v319 = vmul.f32 %v115, -0.5
    %v320 = vmul.f32 %v319, 1.442695
    %v321 = vpow.pop %v320
    %v323 = vperm.slane %v321, 0
    %v324 = vlaneseq
    %v325 = vshrl.u32 %v324, 7
    %327 = vset.pattern.permute.xlu0 %v325
    %328 = vperm.xlu0 %327, %v323
    %v329 = vpop.permute.xlu0 %328
    %v330 = vperm.slane %v321, 1
    %v331 = vlaneseq
    %v332 = vshrl.u32 %v331, 7
    %334 = vset.pattern.permute.xlu0 %v332
    %335 = vperm.xlu0 %334, %v330
    %v336 = vpop.permute.xlu0 %335
    %v337 = vperm.slane %v321, 2
    %v338 = vlaneseq
    %v339 = vshrl.u32 %v338, 7
    %341 = vset.pattern.permute.xlu0 %v339
    %342 = vperm.xlu0 %341, %v337
    %v343 = vpop.permute.xlu0 %342
    %v344 = vperm.slane %v321, 3
    %v345 = vlaneseq
    %v346 = vshrl.u32 %v345, 7
    %348 = vset.pattern.permute.xlu0 %v346
    %349 = vperm.xlu0 %348, %v344
    %v350 = vpop.permute.xlu0 %349
    %v351 = vperm.slane %v321, 4
    %v352 = vlaneseq
    %v353 = vshrl.u32 %v352, 7
    %355 = vset.pattern.permute.xlu0 %v353
    %356 = vperm.xlu0 %355, %v351
    %v357 = vpop.permute.xlu0 %356
    %v358 = vperm.slane %v321, 5
    %v359 = vlaneseq
    %v360 = vshrl.u32 %v359, 7
    %362 = vset.pattern.permute.xlu0 %v360
    %363 = vperm.xlu0 %362, %v358
    %v364 = vpop.permute.xlu0 %363
    %v365 = vperm.slane %v321, 6
    %v366 = vlaneseq
    %v367 = vshrl.u32 %v366, 7
    %369 = vset.pattern.permute.xlu0 %v367
    %370 = vperm.xlu0 %369, %v365
    %v371 = vpop.permute.xlu0 %370
    %v372 = vperm.slane %v321, 7
    %v373 = vlaneseq
    %v374 = vshrl.u32 %v373, 7
    %376 = vset.pattern.permute.xlu0 %v374
    %377 = vperm.xlu0 %376, %v372
    %v378 = vpop.permute.xlu0 %377
    %v387 = vmul.f32 %v311, %v329
    %v388 = vmul.f32 %v312, %v336
    %v389 = vmul.f32 %v313, %v343
    %v390 = vmul.f32 %v314, %v350
    %v391 = vmul.f32 %v315, %v357
    %v392 = vmul.f32 %v316, %v364
    %v393 = vmul.f32 %v317, %v371
    %v394 = vmul.f32 %v318, %v378
    %v395 = vmax.f32 %v225, 0.0
    %v396 = vmax.f32 %v228, 0.0
    %v397 = vmax.f32 %v231, 0.0
    %v398 = vmax.f32 %v234, 0.0
    %v399 = vmax.f32 %v237, 0.0
    %v400 = vmax.f32 %v240, 0.0
    %v401 = vmax.f32 %v243, 0.0
    %v402 = vmax.f32 %v246, 0.0
    %v403 = vand.u32 2147483647, %v225
    %v404 = vand.u32 2147483647, %v228
    %v405 = vand.u32 2147483647, %v231
    %v406 = vand.u32 2147483647, %v234
    %v407 = vand.u32 2147483647, %v237
    %v408 = vand.u32 2147483647, %v240
    %v409 = vand.u32 2147483647, %v243
    %v410 = vand.u32 2147483647, %v246
    %v411 = vsub.f32 0.0, %v403
    %v412 = vsub.f32 0.0, %v404
    %v413 = vsub.f32 0.0, %v405
    %v414 = vsub.f32 0.0, %v406
    %v415 = vsub.f32 0.0, %v407
    %v416 = vsub.f32 0.0, %v408
    %v417 = vsub.f32 0.0, %v409
    %v418 = vsub.f32 0.0, %v410
    %v419 = vmul.f32 %v411, 1.442695
    %v420 = vpow.pop %v419
    %v421 = vmul.f32 %v412, 1.442695
    %v422 = vpow.pop %v421
    %v423 = vmul.f32 %v413, 1.442695
    %v424 = vpow.pop %v423
    %v425 = vmul.f32 %v414, 1.442695
    %v426 = vpow.pop %v425
    %v427 = vmul.f32 %v415, 1.442695
    %v428 = vpow.pop %v427
    %v429 = vmul.f32 %v416, 1.442695
    %v430 = vpow.pop %v429
    %v431 = vmul.f32 %v417, 1.442695
    %v432 = vpow.pop %v431
    %v433 = vmul.f32 %v418, 1.442695
    %v434 = vpow.pop %v433
    %v435 = vadd.f32 %v420, 1.0
    %v436 = vadd.f32 %v422, 1.0
    %v437 = vadd.f32 %v424, 1.0
    %v438 = vadd.f32 %v426, 1.0
    %v439 = vadd.f32 %v428, 1.0
    %v440 = vadd.f32 %v430, 1.0
    %v441 = vadd.f32 %v432, 1.0
    %v442 = vadd.f32 %v434, 1.0
    %v443 = vlog2.pop %v435
    %v444 = vmul.f32 %v443, 0.6931472
    %v445 = vlog2.pop %v436
    %v446 = vmul.f32 %v445, 0.6931472
    %v447 = vlog2.pop %v437
    %v448 = vmul.f32 %v447, 0.6931472
    %v449 = vlog2.pop %v438
    %v450 = vmul.f32 %v449, 0.6931472
    %v451 = vlog2.pop %v439
    %v452 = vmul.f32 %v451, 0.6931472
    %v453 = vlog2.pop %v440
    %v454 = vmul.f32 %v453, 0.6931472
    %v455 = vlog2.pop %v441
    %v456 = vmul.f32 %v455, 0.6931472
    %v457 = vlog2.pop %v442
    %v458 = vmul.f32 %v457, 0.6931472
    %v459 = vadd.f32 %v395, %v444
    %v460 = vadd.f32 %v396, %v446
    %v461 = vadd.f32 %v397, %v448
    %v462 = vadd.f32 %v398, %v450
    %v463 = vadd.f32 %v399, %v452
    %v464 = vadd.f32 %v400, %v454
    %v465 = vadd.f32 %v401, %v456
    %v466 = vadd.f32 %v402, %v458
    %v467 = vmul.f32 %v115, -1.0
    %v468 = vmul.f32 %v467, 1.442695
    %v469 = vpow.pop %v468
    %v471 = vperm.slane %v469, 0
    %v472 = vlaneseq
    %v473 = vshrl.u32 %v472, 7
    %475 = vset.pattern.permute.xlu0 %v473
    %476 = vperm.xlu0 %475, %v471
    %v477 = vpop.permute.xlu0 %476
    %v478 = vperm.slane %v469, 1
    %v479 = vlaneseq
    %v480 = vshrl.u32 %v479, 7
    %482 = vset.pattern.permute.xlu0 %v480
    %483 = vperm.xlu0 %482, %v478
    %v484 = vpop.permute.xlu0 %483
    %v485 = vperm.slane %v469, 2
    %v486 = vlaneseq
    %v487 = vshrl.u32 %v486, 7
    %489 = vset.pattern.permute.xlu0 %v487
    %490 = vperm.xlu0 %489, %v485
    %v491 = vpop.permute.xlu0 %490
    %v492 = vperm.slane %v469, 3
    %v493 = vlaneseq
    %v494 = vshrl.u32 %v493, 7
    %496 = vset.pattern.permute.xlu0 %v494
    %497 = vperm.xlu0 %496, %v492
    %v498 = vpop.permute.xlu0 %497
    %v499 = vperm.slane %v469, 4
    %v500 = vlaneseq
    %v501 = vshrl.u32 %v500, 7
    %503 = vset.pattern.permute.xlu0 %v501
    %504 = vperm.xlu0 %503, %v499
    %v505 = vpop.permute.xlu0 %504
    %v506 = vperm.slane %v469, 5
    %v507 = vlaneseq
    %v508 = vshrl.u32 %v507, 7
    %510 = vset.pattern.permute.xlu0 %v508
    %511 = vperm.xlu0 %510, %v506
    %v512 = vpop.permute.xlu0 %511
    %v513 = vperm.slane %v469, 6
    %v514 = vlaneseq
    %v515 = vshrl.u32 %v514, 7
    %517 = vset.pattern.permute.xlu0 %v515
    %518 = vperm.xlu0 %517, %v513
    %v519 = vpop.permute.xlu0 %518
    %v520 = vperm.slane %v469, 7
    %v521 = vlaneseq
    %v522 = vshrl.u32 %v521, 7
    %524 = vset.pattern.permute.xlu0 %v522
    %525 = vperm.xlu0 %524, %v520
    %v526 = vpop.permute.xlu0 %525
    %v535 = vmul.f32 %v459, %v477
    %v536 = vmul.f32 %v460, %v484
    %v537 = vmul.f32 %v461, %v491
    %v538 = vmul.f32 %v462, %v498
    %v539 = vmul.f32 %v463, %v505
    %v540 = vmul.f32 %v464, %v512
    %v541 = vmul.f32 %v465, %v519
    %v542 = vmul.f32 %v466, %v526
    %v543 = vmul.f32 %v535, 7.0
    %v544 = vmul.f32 %v536, 7.0
    %v545 = vmul.f32 %v537, 7.0
    %v546 = vmul.f32 %v538, 7.0
    %v547 = vmul.f32 %v539, 7.0
    %v548 = vmul.f32 %v540, 7.0
    %v549 = vmul.f32 %v541, 7.0
    %v550 = vmul.f32 %v542, 7.0
    %v551 = vadd.f32 %v543, %v387
    %v552 = vadd.f32 %v544, %v388
    %v553 = vadd.f32 %v545, %v389
    %v554 = vadd.f32 %v546, %v390
    %v555 = vadd.f32 %v547, %v391
    %v556 = vadd.f32 %v548, %v392
    %v557 = vadd.f32 %v549, %v393
    %v558 = vadd.f32 %v550, %v394
    %v559 = vadd.f32 %v551, 1e-06
    %v560 = vadd.f32 %v552, 1e-06
    %v561 = vadd.f32 %v553, 1e-06
    %v562 = vadd.f32 %v554, 1e-06
    %v563 = vadd.f32 %v555, 1e-06
    %v564 = vadd.f32 %v556, 1e-06
    %v565 = vadd.f32 %v557, 1e-06
    %v566 = vadd.f32 %v558, 1e-06
    %575 = vset.pattern.permute.xlu0 0
    %576 = vperm.xlu0 %575, %v387
    %v577 = vpop.permute.xlu0 %576
    %578 = vset.pattern.permute.xlu0 0
    %579 = vperm.xlu0 %578, %v388
    %v580 = vpop.permute.xlu0 %579
    %581 = vset.pattern.permute.xlu0 0
    %582 = vperm.xlu0 %581, %v389
    %v583 = vpop.permute.xlu0 %582
    %584 = vset.pattern.permute.xlu0 0
    %585 = vperm.xlu0 %584, %v390
    %v586 = vpop.permute.xlu0 %585
    %587 = vset.pattern.permute.xlu0 0
    %588 = vperm.xlu0 %587, %v391
    %v589 = vpop.permute.xlu0 %588
    %590 = vset.pattern.permute.xlu0 0
    %591 = vperm.xlu0 %590, %v392
    %v592 = vpop.permute.xlu0 %591
    %593 = vset.pattern.permute.xlu0 0
    %594 = vperm.xlu0 %593, %v393
    %v595 = vpop.permute.xlu0 %594
    %596 = vset.pattern.permute.xlu0 0
    %597 = vperm.xlu0 %596, %v394
    %v598 = vpop.permute.xlu0 %597
    %v599 = vperm.slane %v577, %v92
    %v600 = vperm.slane %v580, %v92
    %v601 = vperm.slane %v583, %v92
    %v602 = vperm.slane %v586, %v92
    %v603 = vperm.slane %v589, %v92
    %v604 = vperm.slane %v592, %v92
    %v605 = vperm.slane %v595, %v92
    %v606 = vperm.slane %v598, %v92
    %vm607 = vcmask 1041409
    %v608 = vsel %vm607, %v600, %v599
    %vm609 = vcmask 1042434
    %v610 = vsel %vm609, %v601, %v608
    %vm611 = vcmask 1043459
    %v612 = vsel %vm611, %v602, %v610
    %vm613 = vcmask 1044484
    %v614 = vsel %vm613, %v603, %v612
    %vm615 = vcmask 1045509
    %v616 = vsel %vm615, %v604, %v614
    %vm617 = vcmask 1046534
    %v618 = vsel %vm617, %v605, %v616
    %vm619 = vcmask 1047559
    %v620 = vsel %vm619, %v606, %v618
    %630 = vset.pattern.permute.xlu0 0
    %631 = vperm.xlu0 %630, %v535
    %v632 = vpop.permute.xlu0 %631
    %633 = vset.pattern.permute.xlu0 0
    %634 = vperm.xlu0 %633, %v536
    %v635 = vpop.permute.xlu0 %634
    %636 = vset.pattern.permute.xlu0 0
    %637 = vperm.xlu0 %636, %v537
    %v638 = vpop.permute.xlu0 %637
    %639 = vset.pattern.permute.xlu0 0
    %640 = vperm.xlu0 %639, %v538
    %v641 = vpop.permute.xlu0 %640
    %642 = vset.pattern.permute.xlu0 0
    %643 = vperm.xlu0 %642, %v539
    %v644 = vpop.permute.xlu0 %643
    %645 = vset.pattern.permute.xlu0 0
    %646 = vperm.xlu0 %645, %v540
    %v647 = vpop.permute.xlu0 %646
    %648 = vset.pattern.permute.xlu0 0
    %649 = vperm.xlu0 %648, %v541
    %v650 = vpop.permute.xlu0 %649
    %651 = vset.pattern.permute.xlu0 0
    %652 = vperm.xlu0 %651, %v542
    %v653 = vpop.permute.xlu0 %652
    %v654 = vperm.slane %v632, %v92
    %v655 = vperm.slane %v635, %v92
    %v656 = vperm.slane %v638, %v92
    %v657 = vperm.slane %v641, %v92
    %v658 = vperm.slane %v644, %v92
    %v659 = vperm.slane %v647, %v92
    %v660 = vperm.slane %v650, %v92
    %v661 = vperm.slane %v653, %v92
    %v662 = vsel %vm607, %v655, %v654
    %v663 = vsel %vm609, %v656, %v662
    %v664 = vsel %vm611, %v657, %v663
    %v665 = vsel %vm613, %v658, %v664
    %v666 = vsel %vm615, %v659, %v665
    %v667 = vsel %vm617, %v660, %v666
    %v668 = vsel %vm619, %v661, %v667
    %v670 = vsel %vm108, %v620, %v668
    %679 = vset.pattern.permute.xlu0 0
    %680 = vperm.xlu0 %679, %v559
    %v681 = vpop.permute.xlu0 %680
    %682 = vset.pattern.permute.xlu0 0
    %683 = vperm.xlu0 %682, %v560
    %v684 = vpop.permute.xlu0 %683
    %685 = vset.pattern.permute.xlu0 0
    %686 = vperm.xlu0 %685, %v561
    %v687 = vpop.permute.xlu0 %686
    %688 = vset.pattern.permute.xlu0 0
    %689 = vperm.xlu0 %688, %v562
    %v690 = vpop.permute.xlu0 %689
    %691 = vset.pattern.permute.xlu0 0
    %692 = vperm.xlu0 %691, %v563
    %v693 = vpop.permute.xlu0 %692
    %694 = vset.pattern.permute.xlu0 0
    %695 = vperm.xlu0 %694, %v564
    %v696 = vpop.permute.xlu0 %695
    %697 = vset.pattern.permute.xlu0 0
    %698 = vperm.xlu0 %697, %v565
    %v699 = vpop.permute.xlu0 %698
    %700 = vset.pattern.permute.xlu0 0
    %701 = vperm.xlu0 %700, %v566
    %v702 = vpop.permute.xlu0 %701
    %v703 = vperm.slane %v681, %v92
    %v704 = vperm.slane %v684, %v92
    %v705 = vperm.slane %v687, %v92
    %v706 = vperm.slane %v690, %v92
    %v707 = vperm.slane %v693, %v92
    %v708 = vperm.slane %v696, %v92
    %v709 = vperm.slane %v699, %v92
    %v710 = vperm.slane %v702, %v92
    %v711 = vsel %vm607, %v704, %v703
    %v712 = vsel %vm609, %v705, %v711
    %v713 = vsel %vm611, %v706, %v712
    %v714 = vsel %vm613, %v707, %v713
    %v715 = vsel %vm615, %v708, %v714
    %v716 = vsel %vm617, %v709, %v715
    %v717 = vsel %vm619, %v710, %v716
    %v719 = vrcp.pop %v717
    %v720 = vmul.f32 %v717, %v719
    %v721 = vsub.f32 1.0, %v720
    %v722 = vmul.f32 %v719, %v721
    %v723 = vadd.f32 %v719, %v722
    %vm724 = vweird.f32 %v717
    %vm725 = vweird.f32 %v719
    %vm726 = vmor %vm724, %vm725
    %v727 = vsel %vm726, %v719, %v723
    %v728 = vand.u32 2147483647, %v717
    %vm729 = vcmp.eq.f32.partialorder %v728, 8.507059e+37
    %v730 = vand.u32 %v717, 2147483648
    %v731 = vor.u32 1.1754944e-38, %v730
    %v732 = vsel %vm729, %v731, %v727
    %v733 = vmul.f32 %v670, %v732
    %v734 = vadd.f32 %v733, 1e-06
    %v735 = vlog2.pop %v734
    %v736 = vmul.f32 %v735, 0.6931472
    %vm737 = vcmask 64512
    %v738 = vsel %vm737, %v736, 0.0
    %739 = vadd.xlane.f32.xlu0 %v738
    %v740 = vpop.xlane.xlu0 %739
    %v741 = vrot.slane %v740, 4
    %v742 = vadd.f32 %v740, %v741
    %v743 = vrot.slane %v742, 2
    %v744 = vadd.f32 %v742, %v743
    %v745 = vrot.slane %v744, 1
    %v746 = vadd.f32 %v744, %v745
    %s747 = vtos %v746
    %p748 = scmp.eq.s32.totalorder 0, 0
    // Predicated region
    $region50: #{tpu_custom_call.1} parent=1 // pred_check
      %p749 = pneg %p748
    $region51: #{tpu_custom_call.1} parent=1 // pred_check_branch
      %751 = sbr.rel (%p749) target = $region53
    $region52: #{tpu_custom_call.1} parent=1 // pred_region
      %s752 = scalar_lea.smem [#allocation10], 0
      %753 = sst [smem:[%s752]] 0.0
    $region53: #{tpu_custom_call.1} parent=1 // pred_fallthru
      _
    %s754 = sld [smem:[#allocation10]]
    %s755 = ssub.f32 0.0, %s747
    %s756 = smul.f32 %s755, 0.125
    %s757 = sadd.f32 %s754, %s756
    %s758 = scalar_lea.smem [#allocation10], 0
    %759 = sst [smem:[%s758]] %s757
    // Predicated region
    $region54: #{tpu_custom_call.1} parent=1 // pred_check
      _
    $region55: #{tpu_custom_call.1} parent=1 // pred_check_branch
      %761 = sbr.rel (0) target = $region57
    $region56: #{tpu_custom_call.1} parent=1 // pred_region
      %763 = vsyncadd [#allocation4], 0
      %s765 = sshll.u32 %s8, 4
      %s766 = int_to_ptr.hbm [resolvable:$true] %s765
      %768 = dma.smem_to_hbm [#allocation10], 16, %s766, [#allocation4]
    $region57: #{tpu_custom_call.1} parent=1 // pred_fallthru
      _
    // Predicated region
    $region58: #{tpu_custom_call.1} parent=1 // pred_check
      _
    $region59: #{tpu_custom_call.1} parent=1 // pred_check_branch
      %770 = sbr.rel (0) target = $region61
    $region60: #{tpu_custom_call.1} parent=1 // pred_region
      %772 = dma.done [#allocation4], 16
    $region61: #{tpu_custom_call.1} parent=1 // pred_fallthru
      _
    %773 = sfence
    %774 = vsyncpa [#allocation3], 1
    %775 = vsyncpa [#allocation6], 1
    %776 = vsyncpa [#allocation9], 1
    %777 = vsyncpa [#allocation4], 1

</llo_original>
